<compile_context>
chip_gen: v7x
topology: tpu7x:2x2x1
jax: 0.10.0
libtpu: 0.0.40
codegen_flags: <defaults>
</compile_context>

<pallas_src>
import jax
import jax.numpy as jnp
from jax import lax
from jax.experimental import pallas as pl
from jax.experimental.pallas import tpu as pltpu


def _round_up(x, m):
    return (x + m - 1) // m * m


def _vmem_budget_bytes():
    """Per-generation VMEM request budget: physical capacity minus headroom."""
    try:
        phys = int(pltpu.get_tpu_info().vmem_capacity_bytes)
    except Exception:
        phys = 64 * 1024 * 1024          # conservative (v7x-sized) fallback
    # Leave ~12 MiB for Mosaic internal scratch / spill; cap at 112 MiB (v5e/v6e).
    return max(32 * 1024 * 1024, min(phys - 12 * 1024 * 1024, 112 * 1024 * 1024))


def _dm_kernel(feat_ref, w_ref, b_ref, out_ref, m_ref, l_ref):
    """One (B-row-block, V-tile) grid step: logits into the resident output block,
    running row max; finalize (last V tile) does exp + row-sum + normalize in place."""
    j = pl.program_id(1)
    nv = pl.num_programs(1)
    tv = w_ref.shape[1]                       # static V tile width (multiple of 128)
    n_v = out_ref.shape[1] // tv              # static number of V tiles (== nv)

    @pl.when(j == 0)
    def _init():
        m_ref[...] = jnp.full(m_ref.shape, -1e30, dtype=jnp.float32)

    # Logits tile: bf16 x bf16 MXU matmul with f32 accumulation; bias add in f32.
    logits = jnp.dot(feat_ref[...], w_ref[...], preferred_element_type=jnp.float32)
    logits = logits + b_ref[...]                              # (TB, TV) + (1, TV)

    # Track only the running row max (exp happens exactly once, in the finalize).
    m_ref[...] = jnp.maximum(m_ref[...], jnp.max(logits, axis=1, keepdims=True))

    # Stash raw logits directly into the VMEM-resident output block (lane-aligned).
    off = pl.multiple_of(j * tv, 128)
    out_ref[:, pl.ds(off, tv)] = logits

    @pl.when(j == nv - 1)
    def _finalize():
        m = m_ref[...]
        l_ref[...] = jnp.zeros(l_ref.shape, dtype=jnp.float32)

        if n_v <= 16:
            # Static unroll: fully static slices -> unmasked lane-dense loads/stores.
            for jj in range(n_v):
                e = jnp.exp(out_ref[:, jj * tv:(jj + 1) * tv] - m)
                l_ref[...] += jnp.sum(e, axis=1, keepdims=True)
                out_ref[:, jj * tv:(jj + 1) * tv] = e
        else:
            def body1(jj, carry):
                o = pl.multiple_of(jj * tv, 128)
                e = jnp.exp(out_ref[:, pl.ds(o, tv)] - m)
                l_ref[...] += jnp.sum(e, axis=1, keepdims=True)
                out_ref[:, pl.ds(o, tv)] = e
                return carry
            lax.fori_loop(0, n_v, body1, 0, unroll=2)

        l = l_ref[...]
        inv = pl.reciprocal(l, approx=True)                   # EUP slot
        inv = inv * (2.0 - l * inv)                           # one Newton step -> full f32 accuracy

        if n_v <= 16:
            for jj in range(n_v):
                out_ref[:, jj * tv:(jj + 1) * tv] = out_ref[:, jj * tv:(jj + 1) * tv] * inv
        else:
            def body2(jj, carry):
                o = pl.multiple_of(jj * tv, 128)
                out_ref[:, pl.ds(o, tv)] = out_ref[:, pl.ds(o, tv)] * inv
                return carry
            lax.fori_loop(0, n_v, body2, 0, unroll=2)


def dm_output_pallas(features, weight_t_bf16, bias_padded, *, b_tile=None, v_tile=1024):
    """softmax(features @ W + b), tiled over (row blocks, vocab tiles)."""
    B, F = features.shape
    Fw, V_pad = weight_t_bf16.shape
    assert Fw == F
    assert v_tile % 128 == 0 and V_pad % v_tile == 0

    budget = _vmem_budget_bytes()

    # --- pick the row-block size from the VMEM budget (multiple of 16 for bf16 LHS) ---
    fixed = 2 * F * v_tile * 2 + 2 * v_tile * 4               # streamed weight + bias tiles
    per_row = 2 * F * 2 + 2 * V_pad * 4 + 2 * 128 * 4         # feat(bf16,x2) + out(f32,x2) + m/l
    if b_tile is None:
        b_tile = (budget - fixed - 4 * 1024 * 1024) // per_row
        b_tile = max(16, min(256, (b_tile // 16) * 16))
    else:
        b_tile = max(16, _round_up(b_tile, 16))
    b_tile = max(16, min(b_tile, _round_up(B, 16)))            # don't over-pad tiny batches
    assert b_tile % 16 == 0

    B_pad = _round_up(B, b_tile)
    if B_pad != B:
        features = jnp.pad(features, ((0, B_pad - B), (0, 0)))
    features = features.astype(jnp.bfloat16)                   # halve feature DMA, packed LHS

    bias2d = bias_padded.reshape(1, V_pad)
    n_v = V_pad // v_tile
    nb = B_pad // b_tile
    grid = (nb, n_v)

    # VMEM: double-buffered inputs + resident full-width output block + small scratch.
    need = (2 * b_tile * F * 2          # bf16 features (resident per row block)
            + 2 * F * v_tile * 2        # bf16 weight tiles (streamed)
            + 2 * v_tile * 4            # bias tiles
            + 2 * b_tile * V_pad * 4    # resident f32 output row block
            + 2 * b_tile * 128 * 4)     # running max / row-sum scratch (lane-padded)
    vmem_limit = int(min(budget, max(32 * 1024 * 1024, need + 4 * 1024 * 1024)))

    cost = pl.CostEstimate(
        flops=2 * B_pad * F * V_pad,
        transcendentals=B_pad * V_pad,
        bytes_accessed=(nb * F * V_pad * 2        # weight re-read once per row block
                        + B_pad * F * 2           # features
                        + nb * V_pad * 4          # bias
                        + B_pad * V_pad * 4))     # output write

    # TODO(synk): on v7x with nb == 1 the "parallel" B axis leaves one TensorCore idle;
    # splitting the V axis across cores with a small max/sum merge is a further opt.
    # TODO(synk): int8 (v5e/v6e) or fp8 (v7x) weight quantization would halve the weight
    # stream again; bf16 output would halve the writeback if the consumer tolerates it.
    out = pl.pallas_call(
        _dm_kernel,
        out_shape=jax.ShapeDtypeStruct((B_pad, V_pad), jnp.float32),
        grid_spec=pltpu.PrefetchScalarGridSpec(
            num_scalar_prefetch=0,
            grid=grid,
            in_specs=[
                pl.BlockSpec((b_tile, F), lambda b, j: (b, 0)),   # features: resident per row block
                pl.BlockSpec((F, v_tile), lambda b, j: (0, j)),   # weight: streamed bf16 tiles
                pl.BlockSpec((1, v_tile), lambda b, j: (0, j)),   # bias tiles
            ],
            out_specs=pl.BlockSpec((b_tile, V_pad), lambda b, j: (b, 0)),  # resident across V
            scratch_shapes=[
                pltpu.VMEM((b_tile, 1), jnp.float32),             # running row max
                pltpu.VMEM((b_tile, 1), jnp.float32),             # row sum (finalize only)
            ]),
        compiler_params=pltpu.CompilerParams(
            dimension_semantics=("parallel", "arbitrary"),
            vmem_limit_bytes=vmem_limit),
        cost_estimate=cost,
    )(features, weight_t_bf16, bias2d)
    return out[:B]


class DistributedMemoryModelJAX:
    """JAX/Pallas re-implementation of the PyTorch DistributedMemoryModel forward."""

    def __init__(self, num_documents, vocab_size, word_embedding_size,
                 document_embedding_size, context_size, key, *, b_tile=None, v_tile=1024):
        self.num_documents = num_documents
        self.vocab_size = vocab_size
        self.word_embedding_size = word_embedding_size
        self.document_embedding_size = document_embedding_size
        self.context_size = context_size
        self.b_tile = b_tile

        in_features = context_size * word_embedding_size + document_embedding_size
        self.in_features = in_features

        # Effective vocab tile: multiple of 128 and no larger than the padded vocab.
        self.v_tile = min(v_tile, _round_up(vocab_size, 256))
        assert self.v_tile % 128 == 0
        self.v_pad = _round_up(vocab_size, self.v_tile)

        k_we, k_pe, k_w, k_b = jax.random.split(key, 4)

        # nn.Embedding default init: N(0, 1)
        self.word_embeddings = jax.random.normal(
            k_we, (vocab_size, word_embedding_size), dtype=jnp.float32)
        self.paragraph_embeddings = jax.random.normal(
            k_pe, (num_documents, document_embedding_size), dtype=jnp.float32)

        # nn.Linear default init: U(-1/sqrt(in), 1/sqrt(in)) for weight and bias
        bound = 1.0 / (in_features ** 0.5)
        w = jax.random.uniform(k_w, (vocab_size, in_features),
                               minval=-bound, maxval=bound, dtype=jnp.float32)
        b = jax.random.uniform(k_b, (vocab_size,),
                               minval=-bound, maxval=bound, dtype=jnp.float32)

        # Pre-transpose to (F, V), pad V lane-dense, store bf16 (halves the dominant
        # weight HBM stream; the MXU still accumulates in f32).
        w_t = jnp.zeros((in_features, self.v_pad), jnp.float32).at[:, :vocab_size].set(w.T)
        self.weight_t_bf16 = w_t.astype(jnp.bfloat16)
        # Padded vocab columns get a huge negative bias so exp() underflows to 0 and the
        # padding never contaminates the softmax max/sum.
        self.bias_padded = jnp.full((self.v_pad,), -1e30, jnp.float32).at[:vocab_size].set(b)

    def __call__(self, x):
        # x: (B, 1 + context_size) int32
        # TODO(synk): the embedding gather + concat is left to XLA (jnp.take); fusing it
        # into the kernel via scalar-prefetched indices + per-row DMA is a further opt.
        paragraph_embedding = jnp.take(self.paragraph_embeddings, x[:, 0], axis=0)
        word_embeddings = jnp.take(self.word_embeddings, x[:, 1:], axis=0)
        word_embeddings = word_embeddings.reshape(x.shape[0], -1)     # flatten(start_dim=1)
        features = jnp.concatenate([paragraph_embedding, word_embeddings], axis=1)
        probs = dm_output_pallas(features, self.weight_t_bf16, self.bias_padded,
                                 b_tile=self.b_tile, v_tile=self.v_tile)
        return probs[:, :self.vocab_size]


if __name__ == "__main__":
    # Small shapes consistent with the module.  vocab_size is NOT a multiple of 128 and
    # batch is NOT a multiple of the row tile, so padded/masked paths are exercised;
    # v_tile=256 gives 2 vocab tiles so the running-max carry + finalize loop are real.
    num_documents = 10
    vocab_size = 500
    word_embedding_size = 16
    document_embedding_size = 32
    context_size = 6          # F = 32 + 6*16 = 128
    batch = 12

    key = jax.random.PRNGKey(0)
    k_model, k_para, k_words = jax.random.split(key, 3)

    model = DistributedMemoryModelJAX(
        num_documents, vocab_size, word_embedding_size,
        document_embedding_size, context_size, k_model,
        v_tile=256)

    para_ids = jax.random.randint(k_para, (batch, 1), 0, num_documents, dtype=jnp.int32)
    word_ids = jax.random.randint(k_words, (batch, context_size), 0, vocab_size, dtype=jnp.int32)
    x = jnp.concatenate([para_ids, word_ids], axis=1)  # (B, 1 + context_size)

    out = jax.block_until_ready(model(x))

    # Reference of the same math (bf16-rounded weights/features, f32 accumulation).
    feat = jnp.concatenate(
        [jnp.take(model.paragraph_embeddings, x[:, 0], axis=0),
         jnp.take(model.word_embeddings, x[:, 1:], axis=0).reshape(batch, -1)], axis=1)
    w_used = model.weight_t_bf16[:, :vocab_size].astype(jnp.float32)
    logits_ref = feat.astype(jnp.bfloat16).astype(jnp.float32) @ w_used \
        + model.bias_padded[:vocab_size]
    ref = jax.nn.softmax(logits_ref, axis=1)

    assert out.shape == (batch, vocab_size)
    assert bool(jnp.all(jnp.isfinite(out)))
    assert jnp.allclose(jnp.sum(out, axis=1), 1.0, atol=1e-4)
    assert jnp.allclose(out, ref, atol=1e-4)

    print("KERNEL_OK")
</pallas_src>

<mosaic_0001>
module attributes {stable_mosaic.version = 11 : i64} {
  func.func @_dm_kernel(%arg0: i32, %arg1: i32, %arg2: memref<16x128xbf16, #tpu.memory_space<vmem>>, %arg3: memref<128x256xbf16, #tpu.memory_space<vmem>>, %arg4: memref<1x256xf32, #tpu.memory_space<vmem>>, %arg5: memref<16x512xf32, #tpu.memory_space<vmem>>, %arg6: memref<16x1xf32, #tpu.memory_space<vmem>>, %arg7: memref<16x1xf32, #tpu.memory_space<vmem>>) attributes {dimension_semantics = [#tpu.dimension_semantics<parallel>, #tpu.dimension_semantics<arbitrary>], iteration_bounds = array<i64: 1, 2>, scalar_prefetch = 0 : i64, scratch_operands = 2 : i64, tpu.core_type = #tpu.core_type<tc>, window_params = [{transform_indices = @transform_0, window_bounds = array<i64: 16, 128>}, {transform_indices = @transform_1, window_bounds = array<i64: 128, 256>}, {transform_indices = @transform_2, window_bounds = array<i64: 1, 256>}, {transform_indices = @transform_3, window_bounds = array<i64: 16, 512>}]} {
    %c0_i32 = arith.constant 0 : i32
    %0 = arith.cmpi eq, %arg1, %c0_i32 : i32
    %1 = arith.extui %0 : i1 to i32
    %c0_i32_0 = arith.constant 0 : i32
    %2 = arith.cmpi ne, %1, %c0_i32_0 : i32
    scf.if %2 {
      %cst_13 = arith.constant -1.000000e+30 : f32
      %21 = vector.broadcast %cst_13 : f32 to vector<16x1xf32>
      %c0_14 = arith.constant 0 : index
      %c0_15 = arith.constant 0 : index
      %22 = vector.load %arg6[%c0_14, %c0_15] : memref<16x1xf32, #tpu.memory_space<vmem>>, vector<16x1xf32>
      tpu.vector_store %arg6[%c0_14, %c0_15], %21 {strides = array<i32>} : memref<16x1xf32, #tpu.memory_space<vmem>>, vector<16x1xf32>,
    } else {
    }
    %c0 = arith.constant 0 : index
    %c0_1 = arith.constant 0 : index
    %3 = vector.load %arg2[%c0, %c0_1] : memref<16x128xbf16, #tpu.memory_space<vmem>>, vector<16x128xbf16>
    %c0_2 = arith.constant 0 : index
    %c0_3 = arith.constant 0 : index
    %4 = vector.load %arg3[%c0_2, %c0_3] : memref<128x256xbf16, #tpu.memory_space<vmem>>, vector<128x256xbf16>
    %cst = arith.constant dense<0.000000e+00> : vector<16x256xf32>
    %5 = tpu.matmul %3, %4, %cst {dimension_numbers = #tpu.dot_dimension_numbers<[1], [0], [0], [1], [0, 0, 1, 1], [], []>} : vector<16x128xbf16>, vector<128x256xbf16>, vector<16x256xf32> -> vector<16x256xf32>
    %c0_4 = arith.constant 0 : index
    %c0_5 = arith.constant 0 : index
    %6 = vector.load %arg4[%c0_4, %c0_5] : memref<1x256xf32, #tpu.memory_space<vmem>>, vector<1x256xf32>
    %7 = vector.broadcast %6 : vector<1x256xf32> to vector<16x256xf32>
    %8 = arith.addf %5, %7 : vector<16x256xf32>
    %c0_6 = arith.constant 0 : index
    %c0_7 = arith.constant 0 : index
    %9 = vector.load %arg6[%c0_6, %c0_7] : memref<16x1xf32, #tpu.memory_space<vmem>>, vector<16x1xf32>
    %cst_8 = arith.constant dense<0xFF800000> : vector<16xf32>
    %10 = vector.multi_reduction <maximumf>, %8, %cst_8 [1] : vector<16x256xf32> to vector<16xf32>
    %11 = vector.shape_cast %10 : vector<16xf32> to vector<16x1xf32>
    %12 = arith.maximumf %9, %11 : vector<16x1xf32>
    %c0_9 = arith.constant 0 : index
    %c0_10 = arith.constant 0 : index
    %13 = vector.load %arg6[%c0_9, %c0_10] : memref<16x1xf32, #tpu.memory_space<vmem>>, vector<16x1xf32>
    tpu.vector_store %arg6[%c0_9, %c0_10], %12 {strides = array<i32>} : memref<16x1xf32, #tpu.memory_space<vmem>>, vector<16x1xf32>,
    %c256_i32 = arith.constant 256 : i32
    %14 = arith.muli %arg1, %c256_i32 : i32
    %15 = tpu.assume_multiple %14, 128 : i32
    %c0_11 = arith.constant 0 : index
    %16 = arith.index_cast %15 : i32 to index
    %17 = vector.load %arg5[%c0_11, %16] : memref<16x512xf32, #tpu.memory_space<vmem>>, vector<16x256xf32>
    tpu.vector_store %arg5[%c0_11, %16], %8 {strides = array<i32>} : memref<16x512xf32, #tpu.memory_space<vmem>>, vector<16x256xf32>,
    %c1_i32 = arith.constant 1 : i32
    %18 = arith.cmpi eq, %arg1, %c1_i32 : i32
    %19 = arith.extui %18 : i1 to i32
    %c0_i32_12 = arith.constant 0 : i32
    %20 = arith.cmpi ne, %19, %c0_i32_12 : i32
    scf.if %20 {
      %c0_13 = arith.constant 0 : index
      %c0_14 = arith.constant 0 : index
      %21 = vector.load %arg6[%c0_13, %c0_14] : memref<16x1xf32, #tpu.memory_space<vmem>>, vector<16x1xf32>
      %cst_15 = arith.constant 0.000000e+00 : f32
      %22 = vector.broadcast %cst_15 : f32 to vector<16x1xf32>
      %c0_16 = arith.constant 0 : index
      %c0_17 = arith.constant 0 : index
      %23 = vector.load %arg7[%c0_16, %c0_17] : memref<16x1xf32, #tpu.memory_space<vmem>>, vector<16x1xf32>
      tpu.vector_store %arg7[%c0_16, %c0_17], %22 {strides = array<i32>} : memref<16x1xf32, #tpu.memory_space<vmem>>, vector<16x1xf32>,
      %c0_18 = arith.constant 0 : index
      %c0_19 = arith.constant 0 : index
      %24 = vector.load %arg5[%c0_18, %c0_19] : memref<16x512xf32, #tpu.memory_space<vmem>>, vector<16x256xf32>
      %25 = vector.broadcast %21 : vector<16x1xf32> to vector<16x256xf32>
      %26 = arith.subf %24, %25 : vector<16x256xf32>
      %27 = math.exp %26 : vector<16x256xf32>
      %c0_20 = arith.constant 0 : index
      %c0_21 = arith.constant 0 : index
      %28 = vector.load %arg7[%c0_20, %c0_21] : memref<16x1xf32, #tpu.memory_space<vmem>>, vector<16x1xf32>
      %cst_22 = arith.constant dense<0.000000e+00> : vector<16xf32>
      %29 = vector.multi_reduction <add>, %27, %cst_22 [1] : vector<16x256xf32> to vector<16xf32>
      %30 = vector.shape_cast %29 : vector<16xf32> to vector<16x1xf32>
      %31 = arith.addf %28, %30 : vector<16x1xf32>
      %c0_23 = arith.constant 0 : index
      %c0_24 = arith.constant 0 : index
      %32 = vector.load %arg7[%c0_23, %c0_24] : memref<16x1xf32, #tpu.memory_space<vmem>>, vector<16x1xf32>
      tpu.vector_store %arg7[%c0_23, %c0_24], %31 {strides = array<i32>} : memref<16x1xf32, #tpu.memory_space<vmem>>, vector<16x1xf32>,
      %c0_25 = arith.constant 0 : index
      %c0_26 = arith.constant 0 : index
      %33 = vector.load %arg5[%c0_25, %c0_26] : memref<16x512xf32, #tpu.memory_space<vmem>>, vector<16x256xf32>
      tpu.vector_store %arg5[%c0_25, %c0_26], %27 {strides = array<i32>} : memref<16x512xf32, #tpu.memory_space<vmem>>, vector<16x256xf32>,
      %c0_27 = arith.constant 0 : index
      %c256 = arith.constant 256 : index
      %34 = vector.load %arg5[%c0_27, %c256] : memref<16x512xf32, #tpu.memory_space<vmem>>, vector<16x256xf32>
      %35 = vector.broadcast %21 : vector<16x1xf32> to vector<16x256xf32>
      %36 = arith.subf %34, %35 : vector<16x256xf32>
      %37 = math.exp %36 : vector<16x256xf32>
      %c0_28 = arith.constant 0 : index
      %c0_29 = arith.constant 0 : index
      %38 = vector.load %arg7[%c0_28, %c0_29] : memref<16x1xf32, #tpu.memory_space<vmem>>, vector<16x1xf32>
      %cst_30 = arith.constant dense<0.000000e+00> : vector<16xf32>
      %39 = vector.multi_reduction <add>, %37, %cst_30 [1] : vector<16x256xf32> to vector<16xf32>
      %40 = vector.shape_cast %39 : vector<16xf32> to vector<16x1xf32>
      %41 = arith.addf %38, %40 : vector<16x1xf32>
      %c0_31 = arith.constant 0 : index
      %c0_32 = arith.constant 0 : index
      %42 = vector.load %arg7[%c0_31, %c0_32] : memref<16x1xf32, #tpu.memory_space<vmem>>, vector<16x1xf32>
      tpu.vector_store %arg7[%c0_31, %c0_32], %41 {strides = array<i32>} : memref<16x1xf32, #tpu.memory_space<vmem>>, vector<16x1xf32>,
      %c0_33 = arith.constant 0 : index
      %c256_34 = arith.constant 256 : index
      %43 = vector.load %arg5[%c0_33, %c256_34] : memref<16x512xf32, #tpu.memory_space<vmem>>, vector<16x256xf32>
      tpu.vector_store %arg5[%c0_33, %c256_34], %37 {strides = array<i32>} : memref<16x512xf32, #tpu.memory_space<vmem>>, vector<16x256xf32>,
      %c0_35 = arith.constant 0 : index
      %c0_36 = arith.constant 0 : index
      %44 = vector.load %arg7[%c0_35, %c0_36] : memref<16x1xf32, #tpu.memory_space<vmem>>, vector<16x1xf32>
      %45 = tpu.reciprocal %44 {approx = true} : vector<16x1xf32> -> vector<16x1xf32>
      %46 = arith.mulf %44, %45 : vector<16x1xf32>
      %cst_37 = arith.constant 2.000000e+00 : f32
      %47 = vector.broadcast %cst_37 : f32 to vector<16x1xf32>
      %48 = arith.subf %47, %46 : vector<16x1xf32>
      %49 = arith.mulf %45, %48 : vector<16x1xf32>
      %c0_38 = arith.constant 0 : index
      %c0_39 = arith.constant 0 : index
      %50 = vector.load %arg5[%c0_38, %c0_39] : memref<16x512xf32, #tpu.memory_space<vmem>>, vector<16x256xf32>
      %51 = vector.broadcast %49 : vector<16x1xf32> to vector<16x256xf32>
      %52 = arith.mulf %50, %51 : vector<16x256xf32>
      %c0_40 = arith.constant 0 : index
      %c0_41 = arith.constant 0 : index
      %53 = vector.load %arg5[%c0_40, %c0_41] : memref<16x512xf32, #tpu.memory_space<vmem>>, vector<16x256xf32>
      tpu.vector_store %arg5[%c0_40, %c0_41], %52 {strides = array<i32>} : memref<16x512xf32, #tpu.memory_space<vmem>>, vector<16x256xf32>,
      %c0_42 = arith.constant 0 : index
      %c256_43 = arith.constant 256 : index
      %54 = vector.load %arg5[%c0_42, %c256_43] : memref<16x512xf32, #tpu.memory_space<vmem>>, vector<16x256xf32>
      %55 = vector.broadcast %49 : vector<16x1xf32> to vector<16x256xf32>
      %56 = arith.mulf %54, %55 : vector<16x256xf32>
      %c0_44 = arith.constant 0 : index
      %c256_45 = arith.constant 256 : index
      %57 = vector.load %arg5[%c0_44, %c256_45] : memref<16x512xf32, #tpu.memory_space<vmem>>, vector<16x256xf32>
      tpu.vector_store %arg5[%c0_44, %c256_45], %56 {strides = array<i32>} : memref<16x512xf32, #tpu.memory_space<vmem>>, vector<16x256xf32>,
    } else {
    }
    return
  }
  func.func @transform_0(%arg0: i32, %arg1: i32) -> (i32, i32) {
    %c0_i32 = arith.constant 0 : i32
    %c0_i32_0 = arith.constant 0 : i32
    return %arg0, %c0_i32 : i32, i32
  }
  func.func @transform_1(%arg0: i32, %arg1: i32) -> (i32, i32) {
    %c0_i32 = arith.constant 0 : i32
    %c0_i32_0 = arith.constant 0 : i32
    return %c0_i32, %arg1 : i32, i32
  }
  func.func @transform_2(%arg0: i32, %arg1: i32) -> (i32, i32) {
    %c0_i32 = arith.constant 0 : i32
    %c0_i32_0 = arith.constant 0 : i32
    return %c0_i32, %arg1 : i32, i32
  }
  func.func @transform_3(%arg0: i32, %arg1: i32) -> (i32, i32) {
    %c0_i32 = arith.constant 0 : i32
    %c0_i32_0 = arith.constant 0 : i32
    return %arg0, %c0_i32 : i32, i32
  }
}

</mosaic_0001>

<llo_original>
// kernel: tpu_custom_call.1
$region0: #{tpu_custom_call.1}
  #allocation0 [shape = 'u32[]', space=smem, size = 0x4, offset = 0x4, fixed_abs, tag = 'smem constant byte address 0x4 - core index']
  #allocation1 [shape = 'u32[144,128]{1,0:T(1,128)}', space=vmem, size = 0x12000, scoped, tag = 'internal scratch']
  #allocation2 [shape = 'f32[16,1]{1,0:T(8,128)}', space=vmem, size = 0x2000, scoped, tag = 'scratch operand']
  #allocation3 [shape = 'f32[16,1]{1,0:T(8,128)}', space=vmem, size = 0x2000, scoped, tag = 'scratch operand']
  %s0 = inlined_call_operand.hbm [shape: bf16[16,128], index: 0, kind: input, shape index: {}]
  %s1 = inlined_call_operand.hbm [shape: bf16[128,512], index: 1, kind: input, shape index: {}]
  %s2 = inlined_call_operand.vmem [shape: f32[1,512], index: 2, kind: input, shape index: {}]
  %s3 = inlined_call_operand.hbm [shape: f32[16,512], index: 3, kind: output, shape index: {}]
  %s4 = sld [smem:[#allocation0]]
  $region61: #{tpu_custom_call.1} parent=0
    _
  %s6 = ssub.s32 1, %s4
  %s7 = scalar_select 0, %s6, %s4
  $region1: #{tpu_custom_call.1} parent=0
    #allocation4 [shape = 'u8[4096]{0}', space=vmem, size = 0x1000, scoped, tag = 'input window, operand 0, single buffered']
    #allocation5 [shape = 's32[2]{0}', space=sflag, size = 0x8, scoped, tag = 'scoped memory for tpu_custom_call.1']
    #allocation6 [shape = 's32[2]{0}', space=sflag, size = 0x8, scoped, tag = 'scoped memory for tpu_custom_call.1']
    #allocation7 [shape = 'u8[131072]{0}', space=vmem, size = 0x20000, scoped, tag = 'input window, operand 1']
    #allocation8 [shape = 's32[2]{0}', space=sflag, size = 0x8, scoped, tag = 'scoped memory for tpu_custom_call.1']
    #allocation9 [shape = 'u8[32768]{0}', space=vmem, size = 0x8000, scoped, tag = 'output window, operand 0, single buffered']
    %8 = vsyncpa [#allocation5], 0
    %9 = vsyncpa [#allocation8], 0
    %s10 = scalar_lea.sflag [#allocation8], 1
    %11 = vsyncpa %s10, 0
    %12 = vsyncpa [#allocation6], 0
    loop: start=0, step=1, limit=4
    $region2: #{tpu_custom_call.1} parent=1 // loop_pre_header
      _
    $region3: #{tpu_custom_call.1} parent=1 // loop_header
      %s14 = sphi 0, %s18
      %p15 = scmp.ge.s32.totalorder %s14, 4
      %s21 = sphi 0, %s33
      %s22 = sphi 0, %s29
      %s23 = sphi 0, %s21
      %s24 = sphi 0, %s22
      %s25 = sphi 0, %s23
      %s26 = sphi 0, %s24
      %s36 = sphi 0, %s38
      %s39 = sphi 0, %s36
      %s40 = sphi 0, %s39
      %s56 = sphi 0, %s40
      %s62 = sphi 0, %s64
      %s65 = sphi 0, %s62
      %s66 = sphi 0, %s65
      %s82 = sphi 0, %s66
      %s88 = sphi 0, %s90
      %s91 = sphi 0, %s88
      %s92 = sphi 0, %s91
      %s108 = sphi 0, %s92
      %s114 = sphi 0, %s116
      %s117 = sphi 0, %s114
      %s118 = sphi 0, %s117
      %s134 = sphi 0, %s118
    $region4: #{tpu_custom_call.1} parent=1 // loop_header_branch
      %17 = sbr.rel (%p15) target = $region8
    $region5: #{tpu_custom_call.1} parent=1 // loop_body
      %s19 = ssub.s32 %s14, 1
      %s20 = ssub.s32 %s14, 2
      %s27 = sadd.s32 1, %s22
      %p28 = scmp.ge.s32.totalorder %s27, 2
      %s29 = scalar_select %p28, 0, %s27
      %s30 = sadd.s32 1, %s21
      %s31 = scalar_select %p28, %s30, %s21
      %p32 = scmp.ge.s32.totalorder %s31, 1
      %s33 = scalar_select %p32, 0, %s31
      %s34 = ssub.s32 %s21, %s33
      %p35 = scmp.eq.s32.totalorder %s34, 0
      %s37 = sadd.s32 %s36, 1
      %s38 = scalar_select %p35, %s36, %s37
      %p41 = pneg %p35
      %p42 = scmp.eq.s32.totalorder %s14, 1
      %p43 = por %p41, %p42
      %p44 = scmp.ne.s32.totalorder %s36, %s39
      %p45 = scmp.eq.s32.totalorder %s14, 0
      %p46 = por %p44, %p45
      %p47 = scmp.ne.s32.totalorder %s36, %s39
      %p48 = scmp.eq.s32.totalorder %s19, 1
      %p49 = por %p47, %p48
      %p50 = scmp.ne.s32.totalorder %s39, %s40
      %p51 = scmp.eq.s32.totalorder %s19, 0
      %p52 = por %p50, %p51
      %p53 = scmp.ne.s32.totalorder %s39, %s40
      %p54 = scmp.eq.s32.totalorder %s20, 1
      %p55 = por %p53, %p54
      %p57 = scmp.ne.s32.totalorder %s40, %s56
      %p58 = scmp.eq.s32.totalorder %s20, 0
      %p59 = por %p57, %p58
      %s60 = ssub.s32 %s22, %s29
      %p61 = scmp.eq.s32.totalorder %s60, 0
      %s63 = sadd.s32 %s62, 1
      %s64 = scalar_select %p61, %s62, %s63
      %p67 = pneg %p61
      %p68 = scmp.eq.s32.totalorder %s14, 1
      %p69 = por %p67, %p68
      %p70 = scmp.ne.s32.totalorder %s62, %s65
      %p71 = scmp.eq.s32.totalorder %s14, 0
      %p72 = por %p70, %p71
      %p73 = scmp.ne.s32.totalorder %s62, %s65
      %p74 = scmp.eq.s32.totalorder %s19, 1
      %p75 = por %p73, %p74
      %p76 = scmp.ne.s32.totalorder %s65, %s66
      %p77 = scmp.eq.s32.totalorder %s19, 0
      %p78 = por %p76, %p77
      %p79 = scmp.ne.s32.totalorder %s65, %s66
      %p80 = scmp.eq.s32.totalorder %s20, 1
      %p81 = por %p79, %p80
      %p83 = scmp.ne.s32.totalorder %s66, %s82
      %p84 = scmp.eq.s32.totalorder %s20, 0
      %p85 = por %p83, %p84
      %s86 = ssub.s32 %s22, %s29
      %p87 = scmp.eq.s32.totalorder %s86, 0
      %s89 = sadd.s32 %s88, 1
      %s90 = scalar_select %p87, %s88, %s89
      %p93 = pneg %p87
      %p94 = scmp.eq.s32.totalorder %s14, 1
      %p95 = por %p93, %p94
      %p96 = scmp.ne.s32.totalorder %s88, %s91
      %p97 = scmp.eq.s32.totalorder %s14, 0
      %p98 = por %p96, %p97
      %p99 = scmp.ne.s32.totalorder %s88, %s91
      %p100 = scmp.eq.s32.totalorder %s19, 1
      %p101 = por %p99, %p100
      %p102 = scmp.ne.s32.totalorder %s91, %s92
      %p103 = scmp.eq.s32.totalorder %s19, 0
      %p104 = por %p102, %p103
      %p105 = scmp.ne.s32.totalorder %s91, %s92
      %p106 = scmp.eq.s32.totalorder %s20, 1
      %p107 = por %p105, %p106
      %p109 = scmp.ne.s32.totalorder %s92, %s108
      %p110 = scmp.eq.s32.totalorder %s20, 0
      %p111 = por %p109, %p110
      %s112 = ssub.s32 %s21, %s33
      %p113 = scmp.eq.s32.totalorder %s112, 0
      %s115 = sadd.s32 %s114, 1
      %s116 = scalar_select %p113, %s114, %s115
      %p119 = pneg %p113
      %p120 = scmp.eq.s32.totalorder %s14, 1
      %p121 = por %p119, %p120
      %p122 = scmp.ne.s32.totalorder %s114, %s117
      %p123 = scmp.eq.s32.totalorder %s14, 0
      %p124 = por %p122, %p123
      %p125 = scmp.ne.s32.totalorder %s114, %s117
      %p126 = scmp.eq.s32.totalorder %s19, 1
      %p127 = por %p125, %p126
      %p128 = scmp.ne.s32.totalorder %s117, %s118
      %p129 = scmp.eq.s32.totalorder %s19, 0
      %p130 = por %p128, %p129
      %p131 = scmp.ne.s32.totalorder %s117, %s118
      %p132 = scmp.eq.s32.totalorder %s20, 1
      %p133 = por %p131, %p132
      %p135 = scmp.ne.s32.totalorder %s118, %s134
      %p136 = scmp.eq.s32.totalorder %s20, 0
      %p137 = por %p135, %p136
      %p138 = scmp.le.s32.totalorder 1, %s14
      %p139 = scmp.lt.s32.totalorder %s14, 3
      %p140 = pnand %p138, %p139
      %p141 = pneg %p140
      // Predicated region
      $region9: #{tpu_custom_call.1} parent=5 // pred_check
        _
      $region10: #{tpu_custom_call.1} parent=5 // pred_check_branch
        %143 = sbr.rel (%p140) target = $region12
      $region11: #{tpu_custom_call.1} parent=5 // pred_region
        %s144 = ssub.s32 %s14, 1
        // Predicated region
        $region13: #{tpu_custom_call.1} parent=11 // pred_check
          %p145 = pneg %p52
        $region14: #{tpu_custom_call.1} parent=11 // pred_check_branch
          %147 = sbr.rel (%p145) target = $region16
        $region15: #{tpu_custom_call.1} parent=11 // pred_region
          %s148 = smul.u32 2, %s23
          %s150 = ssub.s32 128, 128
          %151 = vsyncadd [#allocation5], %s150
          %s152 = smul.addr %s148, 64
          %s153 = scalar_lea.hbm %s0, %s152
          %s154 = sshll.u32 [#allocation4], 4
          %s155 = int_to_ptr.vmem [resolvable:$true] %s154
          %160 = dma.hbm_to_vmem [thread:$0]  %s153, 128, %s155, [#allocation5], 64, 64, 4
        $region16: #{tpu_custom_call.1} parent=11 // pred_fallthru
          _
      $region12: #{tpu_custom_call.1} parent=5 // pred_fallthru
        _
      %p161 = scmp.lt.s32.totalorder %s14, 2
      // Predicated region
      $region17: #{tpu_custom_call.1} parent=5 // pred_check
        %p162 = pneg %p161
      $region18: #{tpu_custom_call.1} parent=5 // pred_check_branch
        %164 = sbr.rel (%p162) target = $region20
      $region19: #{tpu_custom_call.1} parent=5 // pred_region
        // Predicated region
        $region21: #{tpu_custom_call.1} parent=19 // pred_check
          %p165 = pneg %p72
        $region22: #{tpu_custom_call.1} parent=19 // pred_check_branch
          %167 = sbr.rel (%p165) target = $region24
        $region23: #{tpu_custom_call.1} parent=19 // pred_region
          %s168 = sand.u32 %s62, 1
          %s169 = scalar_lea.sflag [#allocation8], %s168
          %s170 = sand.u32 %s62, 1
          %s171 = smul.addr %s170, 128
          %s172 = scalar_lea.vmem [#allocation7], %s171
          %s173 = smul.u32 2, %s22
          %s175 = ssub.s32 2048, 2048
          %176 = vsyncadd %s169, %s175
          %s177 = smul.addr %s173, 64
          %s178 = scalar_lea.hbm %s1, %s177
          %s179 = sshll.u32 %s172, 4
          %s180 = int_to_ptr.vmem [resolvable:$true] %s179
          %185 = dma.hbm_to_vmem [thread:$0]  %s178, 2048, %s180, %s169, 256, 128, 8
        $region24: #{tpu_custom_call.1} parent=19 // pred_fallthru
          _
        // Predicated region
        $region25: #{tpu_custom_call.1} parent=19 // pred_check
          %p186 = pneg %p98
        $region26: #{tpu_custom_call.1} parent=19 // pred_check_branch
          %188 = sbr.rel (%p186) target = $region28
        $region27: #{tpu_custom_call.1} parent=19 // pred_region
          %s189 = smul.u32 2, %s22
          %p190 = scmp.lt.s32.totalorder %s189, 3
          %s191 = scalar_select %p190, %s189, 3
          %s192 = scalar_lea.vmem %s2, %s191
          %s193 = smul.u32 2, %s22
        $region28: #{tpu_custom_call.1} parent=19 // pred_fallthru
          _
      $region20: #{tpu_custom_call.1} parent=5 // pred_fallthru
        _
      %p194 = scmp.le.s32.totalorder 1, %s14
      %p195 = scmp.lt.s32.totalorder %s14, 3
      %p196 = pnand %p194, %p195
      %p197 = pneg %p196
      // Predicated region
      $region29: #{tpu_custom_call.1} parent=5 // pred_check
        _
      $region30: #{tpu_custom_call.1} parent=5 // pred_check_branch
        %199 = sbr.rel (%p196) target = $region32
      $region31: #{tpu_custom_call.1} parent=5 // pred_region
        %s200 = ssub.s32 %s14, 1
        // Predicated region
        $region33: #{tpu_custom_call.1} parent=31 // pred_check
          %p201 = pneg %p52
        $region34: #{tpu_custom_call.1} parent=31 // pred_check_branch
          %203 = sbr.rel (%p201) target = $region36
        $region35: #{tpu_custom_call.1} parent=31 // pred_region
          %204 = dma.done [#allocation5], 128
        $region36: #{tpu_custom_call.1} parent=31 // pred_fallthru
          _
        %s205 = sand.u32 %s65, 1
        %s206 = scalar_lea.sflag [#allocation8], %s205
        %s207 = sand.u32 %s65, 1
        %s208 = smul.addr %s207, 128
        %s209 = scalar_lea.vmem [#allocation7], %s208
        // Predicated region
        $region37: #{tpu_custom_call.1} parent=31 // pred_check
          %p210 = pneg %p78
        $region38: #{tpu_custom_call.1} parent=31 // pred_check_branch
          %212 = sbr.rel (%p210) target = $region40
        $region39: #{tpu_custom_call.1} parent=31 // pred_region
          %213 = dma.done %s206, 2048
        $region40: #{tpu_custom_call.1} parent=31 // pred_fallthru
          _
        %p214 = pneg %p52
        %p215 = pneg %p49
        %s216 = sand.u32 %s65, 1
        %s217 = scalar_lea.sflag [#allocation8], %s216
        %s218 = sand.u32 %s65, 1
        %s219 = smul.addr %s218, 128
        %s220 = scalar_lea.vmem [#allocation7], %s219
        %p221 = pneg %p78
        %p222 = pneg %p75
        %s223 = smul.u32 2, %s24
        %p224 = scmp.lt.s32.totalorder %s223, 3
        %s225 = scalar_select %p224, %s223, 3
        %s226 = scalar_lea.vmem %s2, %s225
        %p227 = pneg %p104
        %p228 = pneg %p101
        %p229 = pneg %p130
        %p230 = pneg %p127
        %s231 = smul.u32 2, %s23
        %s232 = smul.u32 2, %s24
        %s233 = smul.u32 2, %s24
        %p234 = scmp.lt.s32.totalorder %s233, 3
        %s235 = scalar_select %p234, %s233, 3
        %s236 = scalar_lea.vmem %s2, %s235
        %s237 = smul.u32 2, %s24
        %s238 = smul.u32 2, %s23
        %p240 = scmp.eq.s32.totalorder %s24, 0
        // Predicated region
        $region41: #{tpu_custom_call.1} parent=31 // pred_check
          %p241 = pneg %p240
        $region42: #{tpu_custom_call.1} parent=31 // pred_check_branch
          %243 = sbr.rel (%p241) target = $region44
        $region43: #{tpu_custom_call.1} parent=31 // pred_region
          %vm244 = vcmask 7168
          %245 = vst.msk [vmem:[#allocation2] sm:$0xff] %vm244, -1e+30
          %246 = vst.msk [vmem:[#allocation2 + $0x8] sm:$0xff] %vm244, -1e+30
        $region44: #{tpu_custom_call.1} parent=31 // pred_fallthru
          _
        %v247 = vld [vmem:[#allocation4] sm:$0xf]
        %v248 = vld [vmem:[#allocation4 + $0x4] sm:$0xf]
        %v249 = vld [vmem:[%s209] sm:$0xff]
        %v250 = vld [vmem:[%s209 + $0x8] sm:$0xff]
        %v251 = vld [vmem:[%s209 + $0x10] sm:$0xff]
        %v252 = vld [vmem:[%s209 + $0x18] sm:$0xff]
        %v253 = vld [vmem:[%s209 + $0x20] sm:$0xff]
        %v254 = vld [vmem:[%s209 + $0x28] sm:$0xff]
        %v255 = vld [vmem:[%s209 + $0x30] sm:$0xff]
        %v256 = vld [vmem:[%s209 + $0x38] sm:$0xff]
        %v257 = vld [vmem:[%s209 + $0x40] sm:$0xff]
        %v258 = vld [vmem:[%s209 + $0x48] sm:$0xff]
        %v259 = vld [vmem:[%s209 + $0x50] sm:$0xff]
        %v260 = vld [vmem:[%s209 + $0x58] sm:$0xff]
        %v261 = vld [vmem:[%s209 + $0x60] sm:$0xff]
        %v262 = vld [vmem:[%s209 + $0x68] sm:$0xff]
        %v263 = vld [vmem:[%s209 + $0x70] sm:$0xff]
        %v264 = vld [vmem:[%s209 + $0x78] sm:$0xff]
        %v265 = vld [vmem:[%s236] sm:$0x3]
        %v267 = vlaneseq
        %v268 = vshrl.u32 %v267, 7
        %v269 = vsub.s32 0, %v268
        %v270 = vrot.slane %v265, %v269
        %v271 = vlaneseq
        %v272 = vshrl.u32 %v271, 7
        %v273 = vsub.s32 1, %v272
        %v274 = vrot.slane %v265, %v273
        %v279 = vunpack.c.l.b16 %v247
        %v280 = vunpack.c.l.b16 %v248
        %v281 = vpack.c.b16 %v280, %v279
        %v299 = vunpack.c.l.b16 %v249
        %v300 = vunpack.c.h.b16 %v249
        %v301 = vunpack.c.l.b16 %v250
        %v302 = vunpack.c.h.b16 %v250
        %v303 = vunpack.c.l.b16 %v251
        %v304 = vunpack.c.h.b16 %v251
        %v305 = vunpack.c.l.b16 %v252
        %v306 = vunpack.c.h.b16 %v252
        %v307 = vunpack.c.l.b16 %v253
        %v308 = vunpack.c.h.b16 %v253
        %v309 = vunpack.c.l.b16 %v254
        %v310 = vunpack.c.h.b16 %v254
        %v311 = vunpack.c.l.b16 %v255
        %v312 = vunpack.c.h.b16 %v255
        %v313 = vunpack.c.l.b16 %v256
        %v314 = vunpack.c.h.b16 %v256
        %v315 = vunpack.c.l.b16 %v257
        %v316 = vunpack.c.h.b16 %v257
        %v317 = vunpack.c.l.b16 %v258
        %v318 = vunpack.c.h.b16 %v258
        %v319 = vunpack.c.l.b16 %v259
        %v320 = vunpack.c.h.b16 %v259
        %v321 = vunpack.c.l.b16 %v260
        %v322 = vunpack.c.h.b16 %v260
        %v323 = vunpack.c.l.b16 %v261
        %v324 = vunpack.c.h.b16 %v261
        %v325 = vunpack.c.l.b16 %v262
        %v326 = vunpack.c.h.b16 %v262
        %v327 = vunpack.c.l.b16 %v263
        %v328 = vunpack.c.h.b16 %v263
        %v329 = vunpack.c.l.b16 %v264
        %v330 = vunpack.c.h.b16 %v264
        %v331 = vpack.c.b16 %v301, %v299
        %v332 = vpack.c.b16 %v302, %v300
        %v333 = vpack.c.b16 %v305, %v303
        %v334 = vpack.c.b16 %v306, %v304
        %v335 = vpack.c.b16 %v309, %v307
        %v336 = vpack.c.b16 %v310, %v308
        %v337 = vpack.c.b16 %v313, %v311
        %v338 = vpack.c.b16 %v314, %v312
        %v339 = vpack.c.b16 %v317, %v315
        %v340 = vpack.c.b16 %v318, %v316
        %v341 = vpack.c.b16 %v321, %v319
        %v342 = vpack.c.b16 %v322, %v320
        %v343 = vpack.c.b16 %v325, %v323
        %v344 = vpack.c.b16 %v326, %v324
        %v345 = vpack.c.b16 %v329, %v327
        %v346 = vpack.c.b16 %v330, %v328
        %363 = vmatprep.subr.bf16.mxu0 %v332
        %364 = vmatpush1.bf16.msra.mxu0 %v331
        %365 = vmatprep.subr.bf16.mxu0 %v334
        %366 = vmatpush1.bf16.msra.mxu0 %v333
        %367 = vmatprep.subr.bf16.mxu0 %v336
        %368 = vmatpush1.bf16.msra.mxu0 %v335
        %369 = vmatprep.subr.bf16.mxu0 %v338
        %370 = vmatpush1.bf16.msra.mxu0 %v337
        %371 = vmatprep.subr.bf16.mxu0 %v340
        %372 = vmatpush1.bf16.msra.mxu0 %v339
        %373 = vmatprep.subr.bf16.mxu0 %v342
        %374 = vmatpush1.bf16.msra.mxu0 %v341
        %375 = vmatprep.subr.bf16.mxu0 %v344
        %376 = vmatpush1.bf16.msra.mxu0 %v343
        %377 = vmatprep.subr.bf16.mxu0 %v346
        %378 = vmatpush1.bf16.msra.mxu0 %v345
        %379 = vmatprep.subr.bf16.mxu0 0
        %380 = vmatpush1.bf16.msra.mxu0 0
        %381 = vmatprep.subr.bf16.mxu0 0
        %382 = vmatpush1.bf16.msra.mxu0 0
        %383 = vmatprep.subr.bf16.mxu0 0
        %384 = vmatpush1.bf16.msra.mxu0 0
        %385 = vmatprep.subr.bf16.mxu0 0
        %386 = vmatpush1.bf16.msra.mxu0 0
        %387 = vmatprep.subr.bf16.mxu0 0
        %388 = vmatpush1.bf16.msra.mxu0 0
        %389 = vmatprep.subr.bf16.mxu0 0
        %390 = vmatpush1.bf16.msra.mxu0 0
        %391 = vmatprep.subr.bf16.mxu0 0
        %392 = vmatpush1.bf16.msra.mxu0 0
        %393 = vmatprep.subr.bf16.mxu0 0
        %394 = vmatpush1.bf16.msra.mxu0 0
        %395 = vmatprep.mubr.bf16.mxu0 0
        %396 = vmatmul.mubr.bf16.gmra.mrb[0].mxu0 %v281
        %v397 = vpop.f32.mrb[0].mxu0
        %v398 = vadd.f32 %v270, %v397
        %v399 = vpop.f32.mrb[0].mxu0
        %v400 = vadd.f32 %v274, %v399
        %v401 = vpop.f32.mrb[0].mxu0
        %v402 = vadd.f32 %v270, %v401
        %v403 = vpop.f32.mrb[0].mxu0
        %v404 = vadd.f32 %v274, %v403
        %405 = vdwg.mxu0
        %v406 = vld [vmem:[#allocation2] sm:$0xff]
        %v407 = vld [vmem:[#allocation2 + $0x8] sm:$0xff]
        %v408 = vmax.f32 %v398, %v400
        %409 = vmax.xlane.f32.xlu0 %v408
        %v410 = vpop.xlane.xlu0 %409
        %v411 = vmax.f32 %v402, %v404
        %412 = vmax.xlane.f32.xlu0 %v411
        %v413 = vpop.xlane.xlu0 %412
        %v414 = vmax.f32 %v406, %v410
        %v415 = vmax.f32 %v407, %v413
        %vm416 = vcmask 7168
        %417 = vst.msk [vmem:[#allocation2] sm:$0xff] %vm416, %v414
        %418 = vst.msk [vmem:[#allocation2 + $0x8] sm:$0xff] %vm416, %v415
        %s419 = smul.u32 %s24, 256
        %s420 = sshra.s32 %s419, 7
        %s421 = sand.u32 %s419, 127
        %s422 = smul.addr %s420, 8
        %s423 = scalar_lea.vmem [#allocation9], %s422
        %424 = vst [vmem:[%s423] sm:$0xff] %v398
        %425 = vst [vmem:[%s423 + $0x8] sm:$0xff] %v400
        %426 = vst [vmem:[%s423 + $0x20] sm:$0xff] %v402
        %427 = vst [vmem:[%s423 + $0x28] sm:$0xff] %v404
        %p428 = scmp.eq.s32.totalorder %s24, 1
        // Predicated region
        $region45: #{tpu_custom_call.1} parent=31 // pred_check
          %p429 = pneg %p428
        $region46: #{tpu_custom_call.1} parent=31 // pred_check_branch
          %431 = sbr.rel (%p429) target = $region48
        $region47: #{tpu_custom_call.1} parent=31 // pred_region
          %v432 = vld [vmem:[#allocation2] sm:$0xff]
          %v433 = vld [vmem:[#allocation2 + $0x8] sm:$0xff]
          %434 = vst.msk [vmem:[#allocation3] sm:$0xff] %vm416, 0.0
          %435 = vst.msk [vmem:[#allocation3 + $0x8] sm:$0xff] %vm416, 0.0
          %v436 = vld [vmem:[#allocation9] sm:$0xff]
          %v437 = vld [vmem:[#allocation9 + $0x8] sm:$0xff]
          %v438 = vld [vmem:[#allocation9 + $0x20] sm:$0xff]
          %v439 = vld [vmem:[#allocation9 + $0x28] sm:$0xff]
          %441 = vset.pattern.permute.xlu0 0
          %442 = vperm.xlu0 %441, %v432
          %v443 = vpop.permute.xlu0 %442
          %446 = vset.pattern.permute.xlu0 0
          %447 = vperm.xlu0 %446, %v433
          %v448 = vpop.permute.xlu0 %447
          %v450 = vsub.f32 %v436, %v443
          %v451 = vsub.f32 %v437, %v443
          %v452 = vsub.f32 %v438, %v448
          %v453 = vsub.f32 %v439, %v448
          %v454 = vmul.f32 %v450, 1.442695
          %v455 = vpow.pop %v454
          %v456 = vmul.f32 %v451, 1.442695
          %v457 = vpow.pop %v456
          %v458 = vmul.f32 %v452, 1.442695
          %v459 = vpow.pop %v458
          %v460 = vmul.f32 %v453, 1.442695
          %v461 = vpow.pop %v460
          %v462 = vld [vmem:[#allocation3] sm:$0xff]
          %v463 = vld [vmem:[#allocation3 + $0x8] sm:$0xff]
          %v464 = vadd.f32 %v455, %v457
          %465 = vadd.xlane.f32.xlu0 %v464
          %v466 = vpop.xlane.xlu0 %465
          %v467 = vadd.f32 %v459, %v461
          %468 = vadd.xlane.f32.xlu0 %v467
          %v469 = vpop.xlane.xlu0 %468
          %v470 = vadd.f32 %v462, %v466
          %v471 = vadd.f32 %v463, %v469
          %472 = vst.msk [vmem:[#allocation3] sm:$0xff] %vm416, %v470
          %473 = vst.msk [vmem:[#allocation3 + $0x8] sm:$0xff] %vm416, %v471
          %474 = vst [vmem:[#allocation9] sm:$0xff] %v455
          %475 = vst [vmem:[#allocation9 + $0x8] sm:$0xff] %v457
          %476 = vst [vmem:[#allocation9 + $0x20] sm:$0xff] %v459
          %477 = vst [vmem:[#allocation9 + $0x28] sm:$0xff] %v461
          %v478 = vld [vmem:[#allocation9 + $0x10] sm:$0xff]
          %v479 = vld [vmem:[#allocation9 + $0x18] sm:$0xff]
          %v480 = vld [vmem:[#allocation9 + $0x30] sm:$0xff]
          %v481 = vld [vmem:[#allocation9 + $0x38] sm:$0xff]
          %v482 = vsub.f32 %v478, %v443
          %v483 = vsub.f32 %v479, %v443
          %v484 = vsub.f32 %v480, %v448
          %v485 = vsub.f32 %v481, %v448
          %v486 = vmul.f32 %v482, 1.442695
          %v487 = vpow.pop %v486
          %v488 = vmul.f32 %v483, 1.442695
          %v489 = vpow.pop %v488
          %v490 = vmul.f32 %v484, 1.442695
          %v491 = vpow.pop %v490
          %v492 = vmul.f32 %v485, 1.442695
          %v493 = vpow.pop %v492
          %v494 = vld [vmem:[#allocation3] sm:$0xff]
          %v495 = vld [vmem:[#allocation3 + $0x8] sm:$0xff]
          %v496 = vadd.f32 %v487, %v489
          %497 = vadd.xlane.f32.xlu0 %v496
          %v498 = vpop.xlane.xlu0 %497
          %v499 = vadd.f32 %v491, %v493
          %500 = vadd.xlane.f32.xlu0 %v499
          %v501 = vpop.xlane.xlu0 %500
          %v502 = vadd.f32 %v494, %v498
          %v503 = vadd.f32 %v495, %v501
          %504 = vst.msk [vmem:[#allocation3] sm:$0xff] %vm416, %v502
          %505 = vst.msk [vmem:[#allocation3 + $0x8] sm:$0xff] %vm416, %v503
          %506 = vst [vmem:[#allocation9 + $0x10] sm:$0xff] %v487
          %507 = vst [vmem:[#allocation9 + $0x18] sm:$0xff] %v489
          %508 = vst [vmem:[#allocation9 + $0x30] sm:$0xff] %v491
          %509 = vst [vmem:[#allocation9 + $0x38] sm:$0xff] %v493
          %v510 = vld [vmem:[#allocation3] sm:$0xff]
          %v511 = vld [vmem:[#allocation3 + $0x8] sm:$0xff]
          %v512 = vrcp.pop %v510
          %v513 = vrcp.pop %v511
          %v514 = vmul.f32 %v510, %v512
          %v515 = vmul.f32 %v511, %v513
          %v516 = vsub.f32 2.0, %v514
          %v517 = vsub.f32 2.0, %v515
          %v518 = vmul.f32 %v512, %v516
          %v519 = vmul.f32 %v513, %v517
          %v520 = vld [vmem:[#allocation9] sm:$0xff]
          %v521 = vld [vmem:[#allocation9 + $0x8] sm:$0xff]
          %v522 = vld [vmem:[#allocation9 + $0x20] sm:$0xff]
          %v523 = vld [vmem:[#allocation9 + $0x28] sm:$0xff]
          %525 = vset.pattern.permute.xlu0 0
          %526 = vperm.xlu0 %525, %v518
          %v527 = vpop.permute.xlu0 %526
          %530 = vset.pattern.permute.xlu0 0
          %531 = vperm.xlu0 %530, %v519
          %v532 = vpop.permute.xlu0 %531
          %v534 = vmul.f32 %v520, %v527
          %v535 = vmul.f32 %v521, %v527
          %v536 = vmul.f32 %v522, %v532
          %v537 = vmul.f32 %v523, %v532
          %538 = vst [vmem:[#allocation9] sm:$0xff] %v534
          %539 = vst [vmem:[#allocation9 + $0x8] sm:$0xff] %v535
          %540 = vst [vmem:[#allocation9 + $0x20] sm:$0xff] %v536
          %541 = vst [vmem:[#allocation9 + $0x28] sm:$0xff] %v537
          %v542 = vld [vmem:[#allocation9 + $0x10] sm:$0xff]
          %v543 = vld [vmem:[#allocation9 + $0x18] sm:$0xff]
          %v544 = vld [vmem:[#allocation9 + $0x30] sm:$0xff]
          %v545 = vld [vmem:[#allocation9 + $0x38] sm:$0xff]
          %v546 = vmul.f32 %v542, %v527
          %v547 = vmul.f32 %v543, %v527
          %v548 = vmul.f32 %v544, %v532
          %v549 = vmul.f32 %v545, %v532
          %550 = vst [vmem:[#allocation9 + $0x10] sm:$0xff] %v546
          %551 = vst [vmem:[#allocation9 + $0x18] sm:$0xff] %v547
          %552 = vst [vmem:[#allocation9 + $0x30] sm:$0xff] %v548
          %553 = vst [vmem:[#allocation9 + $0x38] sm:$0xff] %v549
        $region48: #{tpu_custom_call.1} parent=31 // pred_fallthru
          _
        // Predicated region
        $region49: #{tpu_custom_call.1} parent=31 // pred_check
          %p554 = pneg %p127
        $region50: #{tpu_custom_call.1} parent=31 // pred_check_branch
          %556 = sbr.rel (%p554) target = $region52
        $region51: #{tpu_custom_call.1} parent=31 // pred_region
          %s557 = smul.u32 2, %s23
          %s559 = ssub.s32 1024, 1024
          %560 = vsyncadd [#allocation6], %s559
          %s561 = smul.addr %s557, 4
          %s562 = smul.addr %s561, 128
          %s563 = scalar_lea.hbm %s3, %s562
          %s564 = sshll.u32 [#allocation9], 4
          %s565 = int_to_ptr.vmem [resolvable:$true] %s564
          %570 = dma.vmem_to_hbm [thread:$0]  %s565, 1024, %s563, [#allocation6], 512, 512, 32
        $region52: #{tpu_custom_call.1} parent=31 // pred_fallthru
          _
        // Predicated region
        $region53: #{tpu_custom_call.1} parent=31 // pred_check
          %p571 = pneg %p127
        $region54: #{tpu_custom_call.1} parent=31 // pred_check_branch
          %573 = sbr.rel (%p571) target = $region56
        $region55: #{tpu_custom_call.1} parent=31 // pred_region
          %574 = dma.done [#allocation6], 1024
        $region56: #{tpu_custom_call.1} parent=31 // pred_fallthru
          _
      $region32: #{tpu_custom_call.1} parent=5 // pred_fallthru
        _
      %p575 = scmp.le.s32.totalorder 2, %s14
      // Predicated region
      $region57: #{tpu_custom_call.1} parent=5 // pred_check
        %p576 = pneg %p575
      $region58: #{tpu_custom_call.1} parent=5 // pred_check_branch
        %578 = sbr.rel (%p576) target = $region60
      $region59: #{tpu_custom_call.1} parent=5 // pred_region
        %s579 = ssub.s32 %s14, 2
      $region60: #{tpu_custom_call.1} parent=5 // pred_fallthru
        _
    $region6: #{tpu_custom_call.1} parent=1 // loop_footer
      %s18 = sadd.s32 1, %s14
    $region7: #{tpu_custom_call.1} parent=1 // loop_footer_branch
      %13 = sbr.rel target = $region3
    $region8: #{tpu_custom_call.1} parent=1 // loop_exit
      _
    %580 = vsyncpa [#allocation5], 1
    %s581 = scalar_lea.sflag [#allocation5], 1
    %582 = vsyncpa %s581, 1
    %583 = vsyncpa [#allocation8], 1
    %s584 = scalar_lea.sflag [#allocation8], 1
    %585 = vsyncpa %s584, 1
    %586 = vsyncpa [#allocation6], 1
    %s587 = scalar_lea.sflag [#allocation6], 1
    %588 = vsyncpa %s587, 1

</llo_original>
